<compile_context>
chip_gen: v7x
topology: tpu7x:2x2x1
jax: 0.10.0
libtpu: 0.0.40
codegen_flags: <defaults>
</compile_context>

<pallas_src>
import functools

import jax
import jax.numpy as jnp
from jax.experimental import pallas as pl
from jax.experimental.pallas import tpu as pltpu


def _round_up(v: int, m: int) -> int:
    return -(-v // m) * m


def _rope_kernel(cos_ref, ssin_ref, x_ref, o_ref, *, d2):
    """One (ts, tb, D, K) tile of RoPE (module semantics).

    cos_ref:  (ts, D, K) f32  -- cos(angle[s, i]) replicated along K
    ssin_ref: (ts, D, K) f32  -- sin(angle[s, i]) with neg_half's sign folded in
                                 (-sin for lane j < d2, +sin for j >= d2)
    x_ref / o_ref: (ts, tb, D, K) in the input dtype
    """
    x = x_ref[...]                       # (ts, tb, D, K)
    cos = cos_ref[...][:, None]          # (ts, 1, D, K): free broadcast over B tile
    ssin = ssin_ref[...][:, None]        # (ts, 1, D, K)

    # In-group partner along K: since K == 2*d2, a circular roll by d2 maps every
    # lane j to its partner (j +/- d2) mod K -- exactly neg_half's source lane
    # (the wrap-around IS the j < d2 case, and roll by half the axis length is
    # direction-independent).  Sign lives in ssin.
    rolled = pltpu.roll(x, d2, axis=3)

    # rope = x*cos + (x*sin)*neg_half(x)  ==  x * (cos + signed_sin * rolled)
    o_ref[...] = (x * (cos + ssin * rolled)).astype(o_ref.dtype)


def _vmem_capacity_bytes() -> int:
    try:
        info = pltpu.get_tpu_info()
        cap = int(getattr(info, "vmem_capacity_bytes", 0) or 0)
        if cap > 0:
            return cap
    except Exception:
        pass
    return 64 * 1024 * 1024  # conservative (v7x-sized) fallback


def _choose_tiles(S, B, D, K, io_itemsize, vmem_cap):
    """Pick (ts, tb) so pipeline buffers + temporaries fit comfortably in VMEM."""
    # Padded VMEM footprint of one (s, b) x slab: (D, K) minor dims -> (8, 128) tiles.
    slab = _round_up(D, 8) * _round_up(K, 128)
    # Per (s, b) slab: 2x-in + 2x-out pipeline buffers in the I/O dtype plus
    # ~3 full-tile f32 temporaries inside the kernel (rolled / factor / product).
    per_sb = slab * (4 * io_itemsize + 3 * 4)
    # Per sequence row: cos + signed-sin blocks (f32), double-buffered.
    per_s_tables = 2 * 2 * slab * 4
    budget = vmem_cap // 3

    tb = max(1, min(B, max(0, budget - per_s_tables) // per_sb))
    per_s = tb * per_sb + per_s_tables
    ts = max(1, min(S, budget // max(1, per_s)))

    # Cap the raw x tile itself: ~4 MiB on 64 MiB parts (v7x), ~8 MiB on 128 MiB
    # parts (v5e / v6e).
    x_tile_cap = (8 << 20) if vmem_cap >= (96 << 20) else (4 << 20)
    ts = max(1, min(ts, x_tile_cap // max(1, tb * slab * io_itemsize)))

    # Keep the grid at >= 4 steps when the problem allows it (pipelining + megacore).
    def nsteps(ts_, tb_):
        return (-(-S // ts_)) * (-(-B // tb_))

    while nsteps(ts, tb) < 4 and ts > 1:
        ts = -(-ts // 2)
    while nsteps(ts, tb) < 4 and tb > 1:
        tb = -(-tb // 2)
    return ts, tb


def rope_pallas(x: jax.Array, d: int, base: int = 10000) -> jax.Array:
    """RoPE forward with the exact semantics of the PyTorch module.

    x: [S, B, D, K] with D == K == d (dim 2 is the cos/sin axis after the
    module's permute; dim 3 is the axis neg_half rotates).
    """
    S, B, D, K = x.shape
    assert D == d, "dim 2 of x must equal d (cos/sin broadcast axis after permute)"
    assert K == d, "dim 3 of x must equal d (neg_half rotation axis)"
    assert d % 2 == 0, "d must be even"
    d2 = d // 2

    # ---- build_cache equivalent (tiny [S, d] angle tables; plain-JAX glue) ----
    theta = 1.0 / jnp.power(jnp.float32(base),
                            jnp.arange(0, d, 2, dtype=jnp.float32) / d)      # [d/2]
    idx_theta = jnp.arange(S, dtype=jnp.float32)[:, None] * theta[None, :]   # [S, d/2]
    angles = jnp.concatenate([idx_theta, idx_theta], axis=-1)                # [S, D]
    cos_sd = jnp.cos(angles)                                                 # [S, D]
    sin_sd = jnp.sin(angles)                                                 # [S, D]

    # Expand along K so the table blocks share x's (D, K) minor dims (in-kernel
    # broadcast is then only over the major B axis) and fold the neg_half sign
    # (- for lane j < d2, + otherwise) into sin.  Tables stay f32 so bf16 inputs
    # keep full-precision angles.  Extra HBM traffic ~2/B of x.
    sign_k = jnp.where(jnp.arange(K) < d2, -1.0, 1.0).astype(jnp.float32)    # [K]
    cos_sdk = jnp.broadcast_to(cos_sd[:, :, None], (S, D, K))                # [S, D, K]
    ssin_sdk = sin_sd[:, :, None] * sign_k[None, None, :]                    # [S, D, K]

    vmem_cap = _vmem_capacity_bytes()
    ts, tb = _choose_tiles(S, B, D, K, x.dtype.itemsize, vmem_cap)
    # b innermost: the table blocks' index does not change between consecutive
    # steps, so Pallas reuses them without re-issuing the DMA.
    grid = (pl.cdiv(S, ts), pl.cdiv(B, tb))

    kernel = functools.partial(_rope_kernel, d2=d2)

    return pl.pallas_call(
        kernel,
        out_shape=jax.ShapeDtypeStruct((S, B, D, K), x.dtype),
        grid=grid,
        in_specs=[
            pl.BlockSpec((ts, D, K), lambda s, b: (s, 0, 0)),         # cos table
            pl.BlockSpec((ts, D, K), lambda s, b: (s, 0, 0)),         # signed-sin table
            pl.BlockSpec((ts, tb, D, K), lambda s, b: (s, b, 0, 0)),  # x
        ],
        out_specs=pl.BlockSpec((ts, tb, D, K), lambda s, b: (s, b, 0, 0)),
        compiler_params=pltpu.CompilerParams(
            dimension_semantics=("parallel", "parallel"),
            vmem_limit_bytes=int(vmem_cap * 3 // 4)),
    )(cos_sdk, ssin_sdk, x)


def rope_ref(x: jax.Array, d: int, base: int = 10000) -> jax.Array:
    """Pure-JAX transcription of the PyTorch forward, for verification.

    NOTE: faithful to the module, the sin term is (x * sin) * neg_half(x) --
    quadratic in x -- not standard RoPE's neg_half(x) * sin.
    """
    S = x.shape[0]
    theta = 1.0 / jnp.power(jnp.float32(base),
                            jnp.arange(0, d, 2, dtype=jnp.float32) / d)
    seq_idx = jnp.arange(S, dtype=jnp.float32)
    idx_theta = seq_idx[:, None] * theta[None, :]
    idx_theta2 = jnp.concatenate([idx_theta, idx_theta], axis=-1)
    cos_cached = jnp.cos(idx_theta2)[:, None, None, :]           # [S,1,1,d]
    sin_cached = jnp.sin(idx_theta2)[:, None, None, :]
    cos_p = jnp.transpose(cos_cached, (0, 1, 3, 2))              # [S,1,d,1]
    sin_p = jnp.transpose(sin_cached, (0, 1, 3, 2))
    d2 = d // 2
    neg_half_x = jnp.concatenate([-x[..., d2:], x[..., :d2]], axis=-1)
    return x * cos_p + (x * sin_p) * neg_half_x


if __name__ == "__main__":
    # Small but representative: seq=8, batch=2, d=128 (canonical RoPE head dim;
    # a lane-aligned trailing axis for the in-kernel roll).  x is [S, B, d, d]
    # as the module's forward implies (dim 2 == dim 3 == d).
    S, B, d = 8, 2, 128
    key = jax.random.PRNGKey(0)
    x = jax.random.normal(key, (S, B, d, d), dtype=jnp.float32)

    out = rope_pallas(x, d=d, base=10000)
    out = jax.block_until_ready(out)

    ref = rope_ref(x, d=d, base=10000)
    assert out.shape == ref.shape and out.dtype == ref.dtype
    assert jnp.allclose(out, ref, atol=1e-5, rtol=1e-5), "mismatch vs reference"

    print("KERNEL_OK")
</pallas_src>

<mosaic_0001>
module attributes {stable_mosaic.version = 11 : i64} {
  func.func @_rope_kernel(%arg0: i32, %arg1: i32, %arg2: memref<2x128x128xf32, #tpu.memory_space<vmem>>, %arg3: memref<2x128x128xf32, #tpu.memory_space<vmem>>, %arg4: memref<2x2x128x128xf32, #tpu.memory_space<vmem>>, %arg5: memref<2x2x128x128xf32, #tpu.memory_space<vmem>>) attributes {dimension_semantics = [#tpu.dimension_semantics<parallel>, #tpu.dimension_semantics<parallel>], iteration_bounds = array<i64: 4, 1>, scalar_prefetch = 0 : i64, scratch_operands = 0 : i64, tpu.core_type = #tpu.core_type<tc>, window_params = [{transform_indices = @transform_0, window_bounds = array<i64: 2, 128, 128>}, {transform_indices = @transform_1, window_bounds = array<i64: 2, 128, 128>}, {transform_indices = @transform_2, window_bounds = array<i64: 2, 2, 128, 128>}, {transform_indices = @transform_3, window_bounds = array<i64: 2, 2, 128, 128>}]} {
    %c0 = arith.constant 0 : index
    %c0_0 = arith.constant 0 : index
    %c0_1 = arith.constant 0 : index
    %c0_2 = arith.constant 0 : index
    %0 = vector.load %arg4[%c0, %c0_0, %c0_1, %c0_2] : memref<2x2x128x128xf32, #tpu.memory_space<vmem>>, vector<2x2x128x128xf32>
    %c0_3 = arith.constant 0 : index
    %c0_4 = arith.constant 0 : index
    %c0_5 = arith.constant 0 : index
    %1 = vector.load %arg2[%c0_3, %c0_4, %c0_5] : memref<2x128x128xf32, #tpu.memory_space<vmem>>, vector<2x128x128xf32>
    %2 = vector.shape_cast %1 : vector<2x128x128xf32> to vector<2x1x128x128xf32>
    %c0_6 = arith.constant 0 : index
    %c0_7 = arith.constant 0 : index
    %c0_8 = arith.constant 0 : index
    %3 = vector.load %arg3[%c0_6, %c0_7, %c0_8] : memref<2x128x128xf32, #tpu.memory_space<vmem>>, vector<2x128x128xf32>
    %4 = vector.shape_cast %3 : vector<2x128x128xf32> to vector<2x1x128x128xf32>
    %c64_i32 = arith.constant 64 : i32
    %5 = tpu.dynamic_rotate %0 by %c64_i32 dim 3 : vector<2x2x128x128xf32>, i32 -> vector<2x2x128x128xf32>
    %6 = vector.broadcast %4 : vector<2x1x128x128xf32> to vector<2x2x128x128xf32>
    %7 = arith.mulf %6, %5 : vector<2x2x128x128xf32>
    %8 = vector.broadcast %2 : vector<2x1x128x128xf32> to vector<2x2x128x128xf32>
    %9 = arith.addf %8, %7 : vector<2x2x128x128xf32>
    %10 = arith.mulf %0, %9 : vector<2x2x128x128xf32>
    %c0_9 = arith.constant 0 : index
    %c0_10 = arith.constant 0 : index
    %c0_11 = arith.constant 0 : index
    %c0_12 = arith.constant 0 : index
    %11 = vector.load %arg5[%c0_9, %c0_10, %c0_11, %c0_12] : memref<2x2x128x128xf32, #tpu.memory_space<vmem>>, vector<2x2x128x128xf32>
    tpu.vector_store %arg5[%c0_9, %c0_10, %c0_11, %c0_12], %10 {strides = array<i32>} : memref<2x2x128x128xf32, #tpu.memory_space<vmem>>, vector<2x2x128x128xf32>,
    return
  }
  func.func @transform_0(%arg0: i32, %arg1: i32) -> (i32, i32, i32) {
    %c0_i32 = arith.constant 0 : i32
    %c0_i32_0 = arith.constant 0 : i32
    %c0_i32_1 = arith.constant 0 : i32
    return %arg0, %c0_i32, %c0_i32_0 : i32, i32, i32
  }
  func.func @transform_1(%arg0: i32, %arg1: i32) -> (i32, i32, i32) {
    %c0_i32 = arith.constant 0 : i32
    %c0_i32_0 = arith.constant 0 : i32
    %c0_i32_1 = arith.constant 0 : i32
    return %arg0, %c0_i32, %c0_i32_0 : i32, i32, i32
  }
  func.func @transform_2(%arg0: i32, %arg1: i32) -> (i32, i32, i32, i32) {
    %c0_i32 = arith.constant 0 : i32
    %c0_i32_0 = arith.constant 0 : i32
    %c0_i32_1 = arith.constant 0 : i32
    return %arg0, %arg1, %c0_i32, %c0_i32_0 : i32, i32, i32, i32
  }
  func.func @transform_3(%arg0: i32, %arg1: i32) -> (i32, i32, i32, i32) {
    %c0_i32 = arith.constant 0 : i32
    %c0_i32_0 = arith.constant 0 : i32
    %c0_i32_1 = arith.constant 0 : i32
    return %arg0, %arg1, %c0_i32, %c0_i32_0 : i32, i32, i32, i32
  }
}

</mosaic_0001>

<llo_original>
// kernel: tpu_custom_call.1
$region0: #{tpu_custom_call.1}
  #allocation0 [shape = 'u32[]', space=smem, size = 0x4, offset = 0x4, fixed_abs, tag = 'smem constant byte address 0x4 - core index']
  #allocation1 [shape = 'u32[144,128]{1,0:T(1,128)}', space=vmem, size = 0x12000, scoped, tag = 'internal scratch']
  %s0 = inlined_call_operand.hbm [shape: f32[8,128,128], index: 0, kind: input, shape index: {}]
  %s1 = inlined_call_operand.hbm [shape: f32[8,128,128], index: 1, kind: input, shape index: {}]
  %s2 = inlined_call_operand.hbm [shape: f32[8,2,128,128], index: 2, kind: input, shape index: {}]
  %s3 = inlined_call_operand.hbm [shape: f32[8,2,128,128], index: 3, kind: output, shape index: {}]
  %s4 = sld [smem:[#allocation0]]
  $region57: #{tpu_custom_call.1} parent=0
    _
  %s6 = ssub.s32 1, %s4
  %s7 = scalar_select 0, %s6, %s4
  $region1: #{tpu_custom_call.1} parent=0
    #allocation2 [shape = 'u8[262144]{0}', space=vmem, size = 0x40000, scoped, tag = 'input window, operand 0']
    #allocation3 [shape = 's32[2]{0}', space=sflag, size = 0x8, scoped, tag = 'scoped memory for tpu_custom_call.1']
    #allocation4 [shape = 's32[2]{0}', space=sflag, size = 0x8, scoped, tag = 'scoped memory for tpu_custom_call.1']
    #allocation5 [shape = 'u8[262144]{0}', space=vmem, size = 0x40000, scoped, tag = 'input window, operand 1']
    #allocation6 [shape = 's32[2]{0}', space=sflag, size = 0x8, scoped, tag = 'scoped memory for tpu_custom_call.1']
    #allocation7 [shape = 'u8[524288]{0}', space=vmem, size = 0x80000, scoped, tag = 'input window, operand 2']
    #allocation8 [shape = 'u8[524288]{0}', space=vmem, size = 0x80000, scoped, tag = 'output window, operand 0']
    %8 = vsyncpa [#allocation3], 0
    %s9 = scalar_lea.sflag [#allocation3], 1
    %10 = vsyncpa %s9, 0
    %11 = vsyncpa [#allocation6], 0
    %s12 = scalar_lea.sflag [#allocation6], 1
    %13 = vsyncpa %s12, 0
    %14 = vsyncpa [#allocation4], 0
    %s15 = scalar_lea.sflag [#allocation4], 1
    %16 = vsyncpa %s15, 0
    loop: start=0, step=1, limit=6
    $region2: #{tpu_custom_call.1} parent=1 // loop_pre_header
      _
    $region3: #{tpu_custom_call.1} parent=1 // loop_header
      %s18 = sphi 0, %s22
      %p19 = scmp.ge.s32.totalorder %s18, 6
      %s25 = sphi 0, %s37
      %s26 = sphi 0, %s33
      %s27 = sphi 0, %s25
      %s28 = sphi 0, %s26
      %s29 = sphi 0, %s27
      %s30 = sphi 0, %s28
      %s40 = sphi 0, %s42
      %s43 = sphi 0, %s40
      %s44 = sphi 0, %s43
      %s60 = sphi 0, %s44
      %s66 = sphi 0, %s68
      %s69 = sphi 0, %s66
      %s70 = sphi 0, %s69
      %s86 = sphi 0, %s70
      %s94 = sphi 0, %s96
      %s97 = sphi 0, %s94
      %s98 = sphi 0, %s97
      %s114 = sphi 0, %s98
      %s122 = sphi 0, %s124
      %s125 = sphi 0, %s122
      %s126 = sphi 0, %s125
      %s142 = sphi 0, %s126
    $region4: #{tpu_custom_call.1} parent=1 // loop_header_branch
      %21 = sbr.rel (%p19) target = $region8
    $region5: #{tpu_custom_call.1} parent=1 // loop_body
      %s23 = ssub.s32 %s18, 1
      %s24 = ssub.s32 %s18, 2
      %s31 = sadd.s32 1, %s26
      %p32 = scmp.ge.s32.totalorder %s31, 1
      %s33 = scalar_select %p32, 0, %s31
      %s34 = sadd.s32 1, %s25
      %s35 = scalar_select %p32, %s34, %s25
      %p36 = scmp.ge.s32.totalorder %s35, 4
      %s37 = scalar_select %p36, 0, %s35
      %s38 = ssub.s32 %s25, %s37
      %p39 = scmp.eq.s32.totalorder %s38, 0
      %s41 = sadd.s32 %s40, 1
      %s42 = scalar_select %p39, %s40, %s41
      %p45 = pneg %p39
      %p46 = scmp.eq.s32.totalorder %s18, 3
      %p47 = por %p45, %p46
      %p48 = scmp.ne.s32.totalorder %s40, %s43
      %p49 = scmp.eq.s32.totalorder %s18, 0
      %p50 = por %p48, %p49
      %p51 = scmp.ne.s32.totalorder %s40, %s43
      %p52 = scmp.eq.s32.totalorder %s23, 3
      %p53 = por %p51, %p52
      %p54 = scmp.ne.s32.totalorder %s43, %s44
      %p55 = scmp.eq.s32.totalorder %s23, 0
      %p56 = por %p54, %p55
      %p57 = scmp.ne.s32.totalorder %s43, %s44
      %p58 = scmp.eq.s32.totalorder %s24, 3
      %p59 = por %p57, %p58
      %p61 = scmp.ne.s32.totalorder %s44, %s60
      %p62 = scmp.eq.s32.totalorder %s24, 0
      %p63 = por %p61, %p62
      %s64 = ssub.s32 %s25, %s37
      %p65 = scmp.eq.s32.totalorder %s64, 0
      %s67 = sadd.s32 %s66, 1
      %s68 = scalar_select %p65, %s66, %s67
      %p71 = pneg %p65
      %p72 = scmp.eq.s32.totalorder %s18, 3
      %p73 = por %p71, %p72
      %p74 = scmp.ne.s32.totalorder %s66, %s69
      %p75 = scmp.eq.s32.totalorder %s18, 0
      %p76 = por %p74, %p75
      %p77 = scmp.ne.s32.totalorder %s66, %s69
      %p78 = scmp.eq.s32.totalorder %s23, 3
      %p79 = por %p77, %p78
      %p80 = scmp.ne.s32.totalorder %s69, %s70
      %p81 = scmp.eq.s32.totalorder %s23, 0
      %p82 = por %p80, %p81
      %p83 = scmp.ne.s32.totalorder %s69, %s70
      %p84 = scmp.eq.s32.totalorder %s24, 3
      %p85 = por %p83, %p84
      %p87 = scmp.ne.s32.totalorder %s70, %s86
      %p88 = scmp.eq.s32.totalorder %s24, 0
      %p89 = por %p87, %p88
      %s90 = ssub.s32 %s25, %s37
      %s91 = ssub.s32 %s26, %s33
      %s92 = sor.u32 %s90, %s91
      %p93 = scmp.eq.s32.totalorder %s92, 0
      %s95 = sadd.s32 %s94, 1
      %s96 = scalar_select %p93, %s94, %s95
      %p99 = pneg %p93
      %p100 = scmp.eq.s32.totalorder %s18, 3
      %p101 = por %p99, %p100
      %p102 = scmp.ne.s32.totalorder %s94, %s97
      %p103 = scmp.eq.s32.totalorder %s18, 0
      %p104 = por %p102, %p103
      %p105 = scmp.ne.s32.totalorder %s94, %s97
      %p106 = scmp.eq.s32.totalorder %s23, 3
      %p107 = por %p105, %p106
      %p108 = scmp.ne.s32.totalorder %s97, %s98
      %p109 = scmp.eq.s32.totalorder %s23, 0
      %p110 = por %p108, %p109
      %p111 = scmp.ne.s32.totalorder %s97, %s98
      %p112 = scmp.eq.s32.totalorder %s24, 3
      %p113 = por %p111, %p112
      %p115 = scmp.ne.s32.totalorder %s98, %s114
      %p116 = scmp.eq.s32.totalorder %s24, 0
      %p117 = por %p115, %p116
      %s118 = ssub.s32 %s25, %s37
      %s119 = ssub.s32 %s26, %s33
      %s120 = sor.u32 %s118, %s119
      %p121 = scmp.eq.s32.totalorder %s120, 0
      %s123 = sadd.s32 %s122, 1
      %s124 = scalar_select %p121, %s122, %s123
      %p127 = pneg %p121
      %p128 = scmp.eq.s32.totalorder %s18, 3
      %p129 = por %p127, %p128
      %p130 = scmp.ne.s32.totalorder %s122, %s125
      %p131 = scmp.eq.s32.totalorder %s18, 0
      %p132 = por %p130, %p131
      %p133 = scmp.ne.s32.totalorder %s122, %s125
      %p134 = scmp.eq.s32.totalorder %s23, 3
      %p135 = por %p133, %p134
      %p136 = scmp.ne.s32.totalorder %s125, %s126
      %p137 = scmp.eq.s32.totalorder %s23, 0
      %p138 = por %p136, %p137
      %p139 = scmp.ne.s32.totalorder %s125, %s126
      %p140 = scmp.eq.s32.totalorder %s24, 3
      %p141 = por %p139, %p140
      %p143 = scmp.ne.s32.totalorder %s126, %s142
      %p144 = scmp.eq.s32.totalorder %s24, 0
      %p145 = por %p143, %p144
      %p146 = scmp.le.s32.totalorder 1, %s18
      %p147 = scmp.lt.s32.totalorder %s18, 5
      %p148 = pnand %p146, %p147
      %p149 = pneg %p148
      // Predicated region
      $region9: #{tpu_custom_call.1} parent=5 // pred_check
        _
      $region10: #{tpu_custom_call.1} parent=5 // pred_check_branch
        %151 = sbr.rel (%p148) target = $region12
      $region11: #{tpu_custom_call.1} parent=5 // pred_region
        %s152 = ssub.s32 %s18, 1
      $region12: #{tpu_custom_call.1} parent=5 // pred_fallthru
        _
      %p153 = scmp.lt.s32.totalorder %s18, 4
      // Predicated region
      $region13: #{tpu_custom_call.1} parent=5 // pred_check
        %p154 = pneg %p153
      $region14: #{tpu_custom_call.1} parent=5 // pred_check_branch
        %156 = sbr.rel (%p154) target = $region16
      $region15: #{tpu_custom_call.1} parent=5 // pred_region
        // Predicated region
        $region17: #{tpu_custom_call.1} parent=15 // pred_check
          %p157 = pneg %p50
        $region18: #{tpu_custom_call.1} parent=15 // pred_check_branch
          %159 = sbr.rel (%p157) target = $region20
        $region19: #{tpu_custom_call.1} parent=15 // pred_region
          %s160 = sand.u32 %s40, 1
          %s161 = scalar_lea.sflag [#allocation3], %s160
          %s162 = sand.u32 %s40, 1
          %s163 = smul.addr %s162, 256
          %s164 = scalar_lea.vmem [#allocation2], %s163
          %s165 = smul.u32 2, %s25
          %s167 = ssub.s32 4096, 4096
          %168 = vsyncadd %s161, %s167
          %s169 = smul.addr %s165, 16
          %s170 = smul.addr %s169, 128
          %s171 = scalar_lea.hbm %s0, %s170
          %s172 = sshll.u32 %s164, 4
          %s173 = int_to_ptr.vmem [resolvable:$true] %s172
          %178 = dma.hbm_to_vmem [thread:$0]  %s171, 4096, %s173, %s161, 128, 128, 8
        $region20: #{tpu_custom_call.1} parent=15 // pred_fallthru
          _
        // Predicated region
        $region21: #{tpu_custom_call.1} parent=15 // pred_check
          %p179 = pneg %p76
        $region22: #{tpu_custom_call.1} parent=15 // pred_check_branch
          %181 = sbr.rel (%p179) target = $region24
        $region23: #{tpu_custom_call.1} parent=15 // pred_region
          %s182 = sand.u32 %s18, 1
          %s183 = scalar_lea.sflag [#allocation6], %s182
          %s184 = sand.u32 %s66, 1
          %s185 = smul.addr %s184, 256
          %s186 = scalar_lea.vmem [#allocation5], %s185
          %s187 = smul.u32 2, %s25
          %s189 = ssub.s32 4096, 4096
          %190 = vsyncadd %s183, %s189
          %s191 = smul.addr %s187, 16
          %s192 = smul.addr %s191, 128
          %s193 = scalar_lea.hbm %s1, %s192
          %s194 = sshll.u32 %s186, 4
          %s195 = int_to_ptr.vmem [resolvable:$true] %s194
          %200 = dma.hbm_to_vmem [thread:$0]  %s193, 4096, %s195, %s183, 128, 128, 8
        $region24: #{tpu_custom_call.1} parent=15 // pred_fallthru
          _
        // Predicated region
        $region25: #{tpu_custom_call.1} parent=15 // pred_check
          %p201 = pneg %p104
        $region26: #{tpu_custom_call.1} parent=15 // pred_check_branch
          %203 = sbr.rel (%p201) target = $region28
        $region27: #{tpu_custom_call.1} parent=15 // pred_region
          %s204 = sand.u32 %s18, 1
          %s205 = scalar_lea.sflag [#allocation6], %s204
          %s206 = sand.u32 %s94, 1
          %s207 = smul.addr %s206, 512
          %s208 = scalar_lea.vmem [#allocation7], %s207
          %s209 = smul.u32 2, %s25
          %s210 = smul.u32 2, %s26
          %s212 = ssub.s32 8192, 8192
          %213 = vsyncadd %s205, %s212
          %s214 = smul.addr %s210, 16
          %s215 = smul.addr %s209, 32
          %s216 = sadd.s32 %s214, %s215
          %s217 = smul.addr %s216, 128
          %s218 = scalar_lea.hbm %s2, %s217
          %s219 = sshll.u32 %s208, 4
          %s220 = int_to_ptr.vmem [resolvable:$true] %s219
          %225 = dma.hbm_to_vmem [thread:$0]  %s218, 8192, %s220, %s205, 128, 128, 8
        $region28: #{tpu_custom_call.1} parent=15 // pred_fallthru
          _
      $region16: #{tpu_custom_call.1} parent=5 // pred_fallthru
        _
      %p226 = scmp.le.s32.totalorder 1, %s18
      %p227 = scmp.lt.s32.totalorder %s18, 5
      %p228 = pnand %p226, %p227
      %p229 = pneg %p228
      // Predicated region
      $region29: #{tpu_custom_call.1} parent=5 // pred_check
        _
      $region30: #{tpu_custom_call.1} parent=5 // pred_check_branch
        %231 = sbr.rel (%p228) target = $region32
      $region31: #{tpu_custom_call.1} parent=5 // pred_region
        %s232 = ssub.s32 %s18, 1
        %s233 = sand.u32 %s43, 1
        %s234 = scalar_lea.sflag [#allocation3], %s233
        %s235 = sand.u32 %s43, 1
        %s236 = smul.addr %s235, 256
        %s237 = scalar_lea.vmem [#allocation2], %s236
        // Predicated region
        $region33: #{tpu_custom_call.1} parent=31 // pred_check
          %p238 = pneg %p56
        $region34: #{tpu_custom_call.1} parent=31 // pred_check_branch
          %240 = sbr.rel (%p238) target = $region36
        $region35: #{tpu_custom_call.1} parent=31 // pred_region
          %241 = dma.done %s234, 4096
        $region36: #{tpu_custom_call.1} parent=31 // pred_fallthru
          _
        %s242 = sand.u32 %s23, 1
        %s243 = scalar_lea.sflag [#allocation6], %s242
        %s244 = sand.u32 %s69, 1
        %s245 = smul.addr %s244, 256
        %s246 = scalar_lea.vmem [#allocation5], %s245
        // Predicated region
        $region37: #{tpu_custom_call.1} parent=31 // pred_check
          %p247 = pneg %p82
        $region38: #{tpu_custom_call.1} parent=31 // pred_check_branch
          %249 = sbr.rel (%p247) target = $region40
        $region39: #{tpu_custom_call.1} parent=31 // pred_region
          %250 = dma.done %s243, 4096
        $region40: #{tpu_custom_call.1} parent=31 // pred_fallthru
          _
        %s251 = sand.u32 %s23, 1
        %s252 = scalar_lea.sflag [#allocation6], %s251
        %s253 = sand.u32 %s97, 1
        %s254 = smul.addr %s253, 512
        %s255 = scalar_lea.vmem [#allocation7], %s254
        // Predicated region
        $region41: #{tpu_custom_call.1} parent=31 // pred_check
          %p256 = pneg %p110
        $region42: #{tpu_custom_call.1} parent=31 // pred_check_branch
          %258 = sbr.rel (%p256) target = $region44
        $region43: #{tpu_custom_call.1} parent=31 // pred_region
          %259 = dma.done %s252, 8192
        $region44: #{tpu_custom_call.1} parent=31 // pred_fallthru
          _
        %s260 = sand.u32 %s43, 1
        %s261 = scalar_lea.sflag [#allocation3], %s260
        %s262 = sand.u32 %s43, 1
        %s263 = smul.addr %s262, 256
        %s264 = scalar_lea.vmem [#allocation2], %s263
        %p265 = pneg %p56
        %p266 = pneg %p53
        %s267 = sand.u32 %s23, 1
        %s268 = scalar_lea.sflag [#allocation6], %s267
        %s269 = sand.u32 %s69, 1
        %s270 = smul.addr %s269, 256
        %s271 = scalar_lea.vmem [#allocation5], %s270
        %p272 = pneg %p82
        %p273 = pneg %p79
        %s274 = sand.u32 %s23, 1
        %s275 = scalar_lea.sflag [#allocation6], %s274
        %s276 = sand.u32 %s97, 1
        %s277 = smul.addr %s276, 512
        %s278 = scalar_lea.vmem [#allocation7], %s277
        %p279 = pneg %p110
        %p280 = pneg %p107
        %p281 = pneg %p138
        %p282 = pneg %p135
        %s283 = sand.u32 %s125, 1
        %s284 = scalar_lea.sflag [#allocation4], %s283
        %s285 = sand.u32 %s125, 1
        %s286 = smul.addr %s285, 512
        %s287 = scalar_lea.vmem [#allocation8], %s286
        %s288 = smul.u32 2, %s27
        %s289 = smul.u32 2, %s27
        %s290 = smul.u32 2, %s27
        %s291 = smul.u32 2, %s28
        %s292 = smul.u32 2, %s27
        %s293 = smul.u32 2, %s28
        %v294 = vld [vmem:[%s255] sm:$0xff]
        %v295 = vld [vmem:[%s255 + $0x8] sm:$0xff]
        %v296 = vld [vmem:[%s255 + $0x10] sm:$0xff]
        %v297 = vld [vmem:[%s255 + $0x18] sm:$0xff]
        %v298 = vld [vmem:[%s255 + $0x20] sm:$0xff]
        %v299 = vld [vmem:[%s255 + $0x28] sm:$0xff]
        %v300 = vld [vmem:[%s255 + $0x30] sm:$0xff]
        %v301 = vld [vmem:[%s255 + $0x38] sm:$0xff]
        %v302 = vld [vmem:[%s255 + $0x40] sm:$0xff]
        %v303 = vld [vmem:[%s255 + $0x48] sm:$0xff]
        %v304 = vld [vmem:[%s255 + $0x50] sm:$0xff]
        %v305 = vld [vmem:[%s255 + $0x58] sm:$0xff]
        %v306 = vld [vmem:[%s255 + $0x60] sm:$0xff]
        %v307 = vld [vmem:[%s255 + $0x68] sm:$0xff]
        %v308 = vld [vmem:[%s255 + $0x70] sm:$0xff]
        %v309 = vld [vmem:[%s255 + $0x78] sm:$0xff]
        %v310 = vld [vmem:[%s255 + $0x80] sm:$0xff]
        %v311 = vld [vmem:[%s255 + $0x88] sm:$0xff]
        %v312 = vld [vmem:[%s255 + $0x90] sm:$0xff]
        %v313 = vld [vmem:[%s255 + $0x98] sm:$0xff]
        %v314 = vld [vmem:[%s255 + $0xa0] sm:$0xff]
        %v315 = vld [vmem:[%s255 + $0xa8] sm:$0xff]
        %v316 = vld [vmem:[%s255 + $0xb0] sm:$0xff]
        %v317 = vld [vmem:[%s255 + $0xb8] sm:$0xff]
        %v318 = vld [vmem:[%s255 + $0xc0] sm:$0xff]
        %v319 = vld [vmem:[%s255 + $0xc8] sm:$0xff]
        %v320 = vld [vmem:[%s255 + $0xd0] sm:$0xff]
        %v321 = vld [vmem:[%s255 + $0xd8] sm:$0xff]
        %v322 = vld [vmem:[%s255 + $0xe0] sm:$0xff]
        %v323 = vld [vmem:[%s255 + $0xe8] sm:$0xff]
        %v324 = vld [vmem:[%s255 + $0xf0] sm:$0xff]
        %v325 = vld [vmem:[%s255 + $0xf8] sm:$0xff]
        %v326 = vld [vmem:[%s255 + $0x100] sm:$0xff]
        %v327 = vld [vmem:[%s255 + $0x108] sm:$0xff]
        %v328 = vld [vmem:[%s255 + $0x110] sm:$0xff]
        %v329 = vld [vmem:[%s255 + $0x118] sm:$0xff]
        %v330 = vld [vmem:[%s255 + $0x120] sm:$0xff]
        %v331 = vld [vmem:[%s255 + $0x128] sm:$0xff]
        %v332 = vld [vmem:[%s255 + $0x130] sm:$0xff]
        %v333 = vld [vmem:[%s255 + $0x138] sm:$0xff]
        %v334 = vld [vmem:[%s255 + $0x140] sm:$0xff]
        %v335 = vld [vmem:[%s255 + $0x148] sm:$0xff]
        %v336 = vld [vmem:[%s255 + $0x150] sm:$0xff]
        %v337 = vld [vmem:[%s255 + $0x158] sm:$0xff]
        %v338 = vld [vmem:[%s255 + $0x160] sm:$0xff]
        %v339 = vld [vmem:[%s255 + $0x168] sm:$0xff]
        %v340 = vld [vmem:[%s255 + $0x170] sm:$0xff]
        %v341 = vld [vmem:[%s255 + $0x178] sm:$0xff]
        %v342 = vld [vmem:[%s255 + $0x180] sm:$0xff]
        %v343 = vld [vmem:[%s255 + $0x188] sm:$0xff]
        %v344 = vld [vmem:[%s255 + $0x190] sm:$0xff]
        %v345 = vld [vmem:[%s255 + $0x198] sm:$0xff]
        %v346 = vld [vmem:[%s255 + $0x1a0] sm:$0xff]
        %v347 = vld [vmem:[%s255 + $0x1a8] sm:$0xff]
        %v348 = vld [vmem:[%s255 + $0x1b0] sm:$0xff]
        %v349 = vld [vmem:[%s255 + $0x1b8] sm:$0xff]
        %v350 = vld [vmem:[%s255 + $0x1c0] sm:$0xff]
        %v351 = vld [vmem:[%s255 + $0x1c8] sm:$0xff]
        %v352 = vld [vmem:[%s255 + $0x1d0] sm:$0xff]
        %v353 = vld [vmem:[%s255 + $0x1d8] sm:$0xff]
        %v354 = vld [vmem:[%s255 + $0x1e0] sm:$0xff]
        %v355 = vld [vmem:[%s255 + $0x1e8] sm:$0xff]
        %v356 = vld [vmem:[%s255 + $0x1f0] sm:$0xff]
        %v357 = vld [vmem:[%s255 + $0x1f8] sm:$0xff]
        %v358 = vld [vmem:[%s237] sm:$0xff]
        %v359 = vld [vmem:[%s237 + $0x8] sm:$0xff]
        %v360 = vld [vmem:[%s237 + $0x10] sm:$0xff]
        %v361 = vld [vmem:[%s237 + $0x18] sm:$0xff]
        %v362 = vld [vmem:[%s237 + $0x20] sm:$0xff]
        %v363 = vld [vmem:[%s237 + $0x28] sm:$0xff]
        %v364 = vld [vmem:[%s237 + $0x30] sm:$0xff]
        %v365 = vld [vmem:[%s237 + $0x38] sm:$0xff]
        %v366 = vld [vmem:[%s237 + $0x40] sm:$0xff]
        %v367 = vld [vmem:[%s237 + $0x48] sm:$0xff]
        %v368 = vld [vmem:[%s237 + $0x50] sm:$0xff]
        %v369 = vld [vmem:[%s237 + $0x58] sm:$0xff]
        %v370 = vld [vmem:[%s237 + $0x60] sm:$0xff]
        %v371 = vld [vmem:[%s237 + $0x68] sm:$0xff]
        %v372 = vld [vmem:[%s237 + $0x70] sm:$0xff]
        %v373 = vld [vmem:[%s237 + $0x78] sm:$0xff]
        %v374 = vld [vmem:[%s237 + $0x80] sm:$0xff]
        %v375 = vld [vmem:[%s237 + $0x88] sm:$0xff]
        %v376 = vld [vmem:[%s237 + $0x90] sm:$0xff]
        %v377 = vld [vmem:[%s237 + $0x98] sm:$0xff]
        %v378 = vld [vmem:[%s237 + $0xa0] sm:$0xff]
        %v379 = vld [vmem:[%s237 + $0xa8] sm:$0xff]
        %v380 = vld [vmem:[%s237 + $0xb0] sm:$0xff]
        %v381 = vld [vmem:[%s237 + $0xb8] sm:$0xff]
        %v382 = vld [vmem:[%s237 + $0xc0] sm:$0xff]
        %v383 = vld [vmem:[%s237 + $0xc8] sm:$0xff]
        %v384 = vld [vmem:[%s237 + $0xd0] sm:$0xff]
        %v385 = vld [vmem:[%s237 + $0xd8] sm:$0xff]
        %v386 = vld [vmem:[%s237 + $0xe0] sm:$0xff]
        %v387 = vld [vmem:[%s237 + $0xe8] sm:$0xff]
        %v388 = vld [vmem:[%s237 + $0xf0] sm:$0xff]
        %v389 = vld [vmem:[%s237 + $0xf8] sm:$0xff]
        %v390 = vld [vmem:[%s246] sm:$0xff]
        %v391 = vld [vmem:[%s246 + $0x8] sm:$0xff]
        %v392 = vld [vmem:[%s246 + $0x10] sm:$0xff]
        %v393 = vld [vmem:[%s246 + $0x18] sm:$0xff]
        %v394 = vld [vmem:[%s246 + $0x20] sm:$0xff]
        %v395 = vld [vmem:[%s246 + $0x28] sm:$0xff]
        %v396 = vld [vmem:[%s246 + $0x30] sm:$0xff]
        %v397 = vld [vmem:[%s246 + $0x38] sm:$0xff]
        %v398 = vld [vmem:[%s246 + $0x40] sm:$0xff]
        %v399 = vld [vmem:[%s246 + $0x48] sm:$0xff]
        %v400 = vld [vmem:[%s246 + $0x50] sm:$0xff]
        %v401 = vld [vmem:[%s246 + $0x58] sm:$0xff]
        %v402 = vld [vmem:[%s246 + $0x60] sm:$0xff]
        %v403 = vld [vmem:[%s246 + $0x68] sm:$0xff]
        %v404 = vld [vmem:[%s246 + $0x70] sm:$0xff]
        %v405 = vld [vmem:[%s246 + $0x78] sm:$0xff]
        %v406 = vld [vmem:[%s246 + $0x80] sm:$0xff]
        %v407 = vld [vmem:[%s246 + $0x88] sm:$0xff]
        %v408 = vld [vmem:[%s246 + $0x90] sm:$0xff]
        %v409 = vld [vmem:[%s246 + $0x98] sm:$0xff]
        %v410 = vld [vmem:[%s246 + $0xa0] sm:$0xff]
        %v411 = vld [vmem:[%s246 + $0xa8] sm:$0xff]
        %v412 = vld [vmem:[%s246 + $0xb0] sm:$0xff]
        %v413 = vld [vmem:[%s246 + $0xb8] sm:$0xff]
        %v414 = vld [vmem:[%s246 + $0xc0] sm:$0xff]
        %v415 = vld [vmem:[%s246 + $0xc8] sm:$0xff]
        %v416 = vld [vmem:[%s246 + $0xd0] sm:$0xff]
        %v417 = vld [vmem:[%s246 + $0xd8] sm:$0xff]
        %v418 = vld [vmem:[%s246 + $0xe0] sm:$0xff]
        %v419 = vld [vmem:[%s246 + $0xe8] sm:$0xff]
        %v420 = vld [vmem:[%s246 + $0xf0] sm:$0xff]
        %v421 = vld [vmem:[%s246 + $0xf8] sm:$0xff]
        %422 = vrot.lane.b32.xlu0 %v294, 64
        %v423 = vpop.permute.xlu0 %422
        %424 = vrot.lane.b32.xlu0 %v295, 64
        %v425 = vpop.permute.xlu0 %424
        %426 = vrot.lane.b32.xlu0 %v296, 64
        %v427 = vpop.permute.xlu0 %426
        %428 = vrot.lane.b32.xlu0 %v297, 64
        %v429 = vpop.permute.xlu0 %428
        %430 = vrot.lane.b32.xlu0 %v298, 64
        %v431 = vpop.permute.xlu0 %430
        %432 = vrot.lane.b32.xlu0 %v299, 64
        %v433 = vpop.permute.xlu0 %432
        %434 = vrot.lane.b32.xlu0 %v300, 64
        %v435 = vpop.permute.xlu0 %434
        %436 = vrot.lane.b32.xlu0 %v301, 64
        %v437 = vpop.permute.xlu0 %436
        %438 = vrot.lane.b32.xlu0 %v302, 64
        %v439 = vpop.permute.xlu0 %438
        %440 = vrot.lane.b32.xlu0 %v303, 64
        %v441 = vpop.permute.xlu0 %440
        %442 = vrot.lane.b32.xlu0 %v304, 64
        %v443 = vpop.permute.xlu0 %442
        %444 = vrot.lane.b32.xlu0 %v305, 64
        %v445 = vpop.permute.xlu0 %444
        %446 = vrot.lane.b32.xlu0 %v306, 64
        %v447 = vpop.permute.xlu0 %446
        %448 = vrot.lane.b32.xlu0 %v307, 64
        %v449 = vpop.permute.xlu0 %448
        %450 = vrot.lane.b32.xlu0 %v308, 64
        %v451 = vpop.permute.xlu0 %450
        %452 = vrot.lane.b32.xlu0 %v309, 64
        %v453 = vpop.permute.xlu0 %452
        %454 = vrot.lane.b32.xlu0 %v310, 64
        %v455 = vpop.permute.xlu0 %454
        %456 = vrot.lane.b32.xlu0 %v311, 64
        %v457 = vpop.permute.xlu0 %456
        %458 = vrot.lane.b32.xlu0 %v312, 64
        %v459 = vpop.permute.xlu0 %458
        %460 = vrot.lane.b32.xlu0 %v313, 64
        %v461 = vpop.permute.xlu0 %460
        %462 = vrot.lane.b32.xlu0 %v314, 64
        %v463 = vpop.permute.xlu0 %462
        %464 = vrot.lane.b32.xlu0 %v315, 64
        %v465 = vpop.permute.xlu0 %464
        %466 = vrot.lane.b32.xlu0 %v316, 64
        %v467 = vpop.permute.xlu0 %466
        %468 = vrot.lane.b32.xlu0 %v317, 64
        %v469 = vpop.permute.xlu0 %468
        %470 = vrot.lane.b32.xlu0 %v318, 64
        %v471 = vpop.permute.xlu0 %470
        %472 = vrot.lane.b32.xlu0 %v319, 64
        %v473 = vpop.permute.xlu0 %472
        %474 = vrot.lane.b32.xlu0 %v320, 64
        %v475 = vpop.permute.xlu0 %474
        %476 = vrot.lane.b32.xlu0 %v321, 64
        %v477 = vpop.permute.xlu0 %476
        %478 = vrot.lane.b32.xlu0 %v322, 64
        %v479 = vpop.permute.xlu0 %478
        %480 = vrot.lane.b32.xlu0 %v323, 64
        %v481 = vpop.permute.xlu0 %480
        %482 = vrot.lane.b32.xlu0 %v324, 64
        %v483 = vpop.permute.xlu0 %482
        %484 = vrot.lane.b32.xlu0 %v325, 64
        %v485 = vpop.permute.xlu0 %484
        %486 = vrot.lane.b32.xlu0 %v326, 64
        %v487 = vpop.permute.xlu0 %486
        %488 = vrot.lane.b32.xlu0 %v327, 64
        %v489 = vpop.permute.xlu0 %488
        %490 = vrot.lane.b32.xlu0 %v328, 64
        %v491 = vpop.permute.xlu0 %490
        %492 = vrot.lane.b32.xlu0 %v329, 64
        %v493 = vpop.permute.xlu0 %492
        %494 = vrot.lane.b32.xlu0 %v330, 64
        %v495 = vpop.permute.xlu0 %494
        %496 = vrot.lane.b32.xlu0 %v331, 64
        %v497 = vpop.permute.xlu0 %496
        %498 = vrot.lane.b32.xlu0 %v332, 64
        %v499 = vpop.permute.xlu0 %498
        %500 = vrot.lane.b32.xlu0 %v333, 64
        %v501 = vpop.permute.xlu0 %500
        %502 = vrot.lane.b32.xlu0 %v334, 64
        %v503 = vpop.permute.xlu0 %502
        %504 = vrot.lane.b32.xlu0 %v335, 64
        %v505 = vpop.permute.xlu0 %504
        %506 = vrot.lane.b32.xlu0 %v336, 64
        %v507 = vpop.permute.xlu0 %506
        %508 = vrot.lane.b32.xlu0 %v337, 64
        %v509 = vpop.permute.xlu0 %508
        %510 = vrot.lane.b32.xlu0 %v338, 64
        %v511 = vpop.permute.xlu0 %510
        %512 = vrot.lane.b32.xlu0 %v339, 64
        %v513 = vpop.permute.xlu0 %512
        %514 = vrot.lane.b32.xlu0 %v340, 64
        %v515 = vpop.permute.xlu0 %514
        %516 = vrot.lane.b32.xlu0 %v341, 64
        %v517 = vpop.permute.xlu0 %516
        %518 = vrot.lane.b32.xlu0 %v342, 64
        %v519 = vpop.permute.xlu0 %518
        %520 = vrot.lane.b32.xlu0 %v343, 64
        %v521 = vpop.permute.xlu0 %520
        %522 = vrot.lane.b32.xlu0 %v344, 64
        %v523 = vpop.permute.xlu0 %522
        %524 = vrot.lane.b32.xlu0 %v345, 64
        %v525 = vpop.permute.xlu0 %524
        %526 = vrot.lane.b32.xlu0 %v346, 64
        %v527 = vpop.permute.xlu0 %526
        %528 = vrot.lane.b32.xlu0 %v347, 64
        %v529 = vpop.permute.xlu0 %528
        %530 = vrot.lane.b32.xlu0 %v348, 64
        %v531 = vpop.permute.xlu0 %530
        %532 = vrot.lane.b32.xlu0 %v349, 64
        %v533 = vpop.permute.xlu0 %532
        %534 = vrot.lane.b32.xlu0 %v350, 64
        %v535 = vpop.permute.xlu0 %534
        %536 = vrot.lane.b32.xlu0 %v351, 64
        %v537 = vpop.permute.xlu0 %536
        %538 = vrot.lane.b32.xlu0 %v352, 64
        %v539 = vpop.permute.xlu0 %538
        %540 = vrot.lane.b32.xlu0 %v353, 64
        %v541 = vpop.permute.xlu0 %540
        %542 = vrot.lane.b32.xlu0 %v354, 64
        %v543 = vpop.permute.xlu0 %542
        %544 = vrot.lane.b32.xlu0 %v355, 64
        %v545 = vpop.permute.xlu0 %544
        %546 = vrot.lane.b32.xlu0 %v356, 64
        %v547 = vpop.permute.xlu0 %546
        %548 = vrot.lane.b32.xlu0 %v357, 64
        %v549 = vpop.permute.xlu0 %548
        %v550 = vmul.f32 %v390, %v423
        %v551 = vmul.f32 %v391, %v425
        %v552 = vmul.f32 %v392, %v427
        %v553 = vmul.f32 %v393, %v429
        %v554 = vmul.f32 %v394, %v431
        %v555 = vmul.f32 %v395, %v433
        %v556 = vmul.f32 %v396, %v435
        %v557 = vmul.f32 %v397, %v437
        %v558 = vmul.f32 %v398, %v439
        %v559 = vmul.f32 %v399, %v441
        %v560 = vmul.f32 %v400, %v443
        %v561 = vmul.f32 %v401, %v445
        %v562 = vmul.f32 %v402, %v447
        %v563 = vmul.f32 %v403, %v449
        %v564 = vmul.f32 %v404, %v451
        %v565 = vmul.f32 %v405, %v453
        %v566 = vmul.f32 %v390, %v455
        %v567 = vmul.f32 %v391, %v457
        %v568 = vmul.f32 %v392, %v459
        %v569 = vmul.f32 %v393, %v461
        %v570 = vmul.f32 %v394, %v463
        %v571 = vmul.f32 %v395, %v465
        %v572 = vmul.f32 %v396, %v467
        %v573 = vmul.f32 %v397, %v469
        %v574 = vmul.f32 %v398, %v471
        %v575 = vmul.f32 %v399, %v473
        %v576 = vmul.f32 %v400, %v475
        %v577 = vmul.f32 %v401, %v477
        %v578 = vmul.f32 %v402, %v479
        %v579 = vmul.f32 %v403, %v481
        %v580 = vmul.f32 %v404, %v483
        %v581 = vmul.f32 %v405, %v485
        %v582 = vmul.f32 %v406, %v487
        %v583 = vmul.f32 %v407, %v489
        %v584 = vmul.f32 %v408, %v491
        %v585 = vmul.f32 %v409, %v493
        %v586 = vmul.f32 %v410, %v495
        %v587 = vmul.f32 %v411, %v497
        %v588 = vmul.f32 %v412, %v499
        %v589 = vmul.f32 %v413, %v501
        %v590 = vmul.f32 %v414, %v503
        %v591 = vmul.f32 %v415, %v505
        %v592 = vmul.f32 %v416, %v507
        %v593 = vmul.f32 %v417, %v509
        %v594 = vmul.f32 %v418, %v511
        %v595 = vmul.f32 %v419, %v513
        %v596 = vmul.f32 %v420, %v515
        %v597 = vmul.f32 %v421, %v517
        %v598 = vmul.f32 %v406, %v519
        %v599 = vmul.f32 %v407, %v521
        %v600 = vmul.f32 %v408, %v523
        %v601 = vmul.f32 %v409, %v525
        %v602 = vmul.f32 %v410, %v527
        %v603 = vmul.f32 %v411, %v529
        %v604 = vmul.f32 %v412, %v531
        %v605 = vmul.f32 %v413, %v533
        %v606 = vmul.f32 %v414, %v535
        %v607 = vmul.f32 %v415, %v537
        %v608 = vmul.f32 %v416, %v539
        %v609 = vmul.f32 %v417, %v541
        %v610 = vmul.f32 %v418, %v543
        %v611 = vmul.f32 %v419, %v545
        %v612 = vmul.f32 %v420, %v547
        %v613 = vmul.f32 %v421, %v549
        %v614 = vadd.f32 %v358, %v550
        %v615 = vadd.f32 %v359, %v551
        %v616 = vadd.f32 %v360, %v552
        %v617 = vadd.f32 %v361, %v553
        %v618 = vadd.f32 %v362, %v554
        %v619 = vadd.f32 %v363, %v555
        %v620 = vadd.f32 %v364, %v556
        %v621 = vadd.f32 %v365, %v557
        %v622 = vadd.f32 %v366, %v558
        %v623 = vadd.f32 %v367, %v559
        %v624 = vadd.f32 %v368, %v560
        %v625 = vadd.f32 %v369, %v561
        %v626 = vadd.f32 %v370, %v562
        %v627 = vadd.f32 %v371, %v563
        %v628 = vadd.f32 %v372, %v564
        %v629 = vadd.f32 %v373, %v565
        %v630 = vadd.f32 %v358, %v566
        %v631 = vadd.f32 %v359, %v567
        %v632 = vadd.f32 %v360, %v568
        %v633 = vadd.f32 %v361, %v569
        %v634 = vadd.f32 %v362, %v570
        %v635 = vadd.f32 %v363, %v571
        %v636 = vadd.f32 %v364, %v572
        %v637 = vadd.f32 %v365, %v573
        %v638 = vadd.f32 %v366, %v574
        %v639 = vadd.f32 %v367, %v575
        %v640 = vadd.f32 %v368, %v576
        %v641 = vadd.f32 %v369, %v577
        %v642 = vadd.f32 %v370, %v578
        %v643 = vadd.f32 %v371, %v579
        %v644 = vadd.f32 %v372, %v580
        %v645 = vadd.f32 %v373, %v581
        %v646 = vadd.f32 %v374, %v582
        %v647 = vadd.f32 %v375, %v583
        %v648 = vadd.f32 %v376, %v584
        %v649 = vadd.f32 %v377, %v585
        %v650 = vadd.f32 %v378, %v586
        %v651 = vadd.f32 %v379, %v587
        %v652 = vadd.f32 %v380, %v588
        %v653 = vadd.f32 %v381, %v589
        %v654 = vadd.f32 %v382, %v590
        %v655 = vadd.f32 %v383, %v591
        %v656 = vadd.f32 %v384, %v592
        %v657 = vadd.f32 %v385, %v593
        %v658 = vadd.f32 %v386, %v594
        %v659 = vadd.f32 %v387, %v595
        %v660 = vadd.f32 %v388, %v596
        %v661 = vadd.f32 %v389, %v597
        %v662 = vadd.f32 %v374, %v598
        %v663 = vadd.f32 %v375, %v599
        %v664 = vadd.f32 %v376, %v600
        %v665 = vadd.f32 %v377, %v601
        %v666 = vadd.f32 %v378, %v602
        %v667 = vadd.f32 %v379, %v603
        %v668 = vadd.f32 %v380, %v604
        %v669 = vadd.f32 %v381, %v605
        %v670 = vadd.f32 %v382, %v606
        %v671 = vadd.f32 %v383, %v607
        %v672 = vadd.f32 %v384, %v608
        %v673 = vadd.f32 %v385, %v609
        %v674 = vadd.f32 %v386, %v610
        %v675 = vadd.f32 %v387, %v611
        %v676 = vadd.f32 %v388, %v612
        %v677 = vadd.f32 %v389, %v613
        %v678 = vmul.f32 %v294, %v614
        %v679 = vmul.f32 %v295, %v615
        %v680 = vmul.f32 %v296, %v616
        %v681 = vmul.f32 %v297, %v617
        %v682 = vmul.f32 %v298, %v618
        %v683 = vmul.f32 %v299, %v619
        %v684 = vmul.f32 %v300, %v620
        %v685 = vmul.f32 %v301, %v621
        %v686 = vmul.f32 %v302, %v622
        %v687 = vmul.f32 %v303, %v623
        %v688 = vmul.f32 %v304, %v624
        %v689 = vmul.f32 %v305, %v625
        %v690 = vmul.f32 %v306, %v626
        %v691 = vmul.f32 %v307, %v627
        %v692 = vmul.f32 %v308, %v628
        %v693 = vmul.f32 %v309, %v629
        %v694 = vmul.f32 %v310, %v630
        %v695 = vmul.f32 %v311, %v631
        %v696 = vmul.f32 %v312, %v632
        %v697 = vmul.f32 %v313, %v633
        %v698 = vmul.f32 %v314, %v634
        %v699 = vmul.f32 %v315, %v635
        %v700 = vmul.f32 %v316, %v636
        %v701 = vmul.f32 %v317, %v637
        %v702 = vmul.f32 %v318, %v638
        %v703 = vmul.f32 %v319, %v639
        %v704 = vmul.f32 %v320, %v640
        %v705 = vmul.f32 %v321, %v641
        %v706 = vmul.f32 %v322, %v642
        %v707 = vmul.f32 %v323, %v643
        %v708 = vmul.f32 %v324, %v644
        %v709 = vmul.f32 %v325, %v645
        %v710 = vmul.f32 %v326, %v646
        %v711 = vmul.f32 %v327, %v647
        %v712 = vmul.f32 %v328, %v648
        %v713 = vmul.f32 %v329, %v649
        %v714 = vmul.f32 %v330, %v650
        %v715 = vmul.f32 %v331, %v651
        %v716 = vmul.f32 %v332, %v652
        %v717 = vmul.f32 %v333, %v653
        %v718 = vmul.f32 %v334, %v654
        %v719 = vmul.f32 %v335, %v655
        %v720 = vmul.f32 %v336, %v656
        %v721 = vmul.f32 %v337, %v657
        %v722 = vmul.f32 %v338, %v658
        %v723 = vmul.f32 %v339, %v659
        %v724 = vmul.f32 %v340, %v660
        %v725 = vmul.f32 %v341, %v661
        %v726 = vmul.f32 %v342, %v662
        %v727 = vmul.f32 %v343, %v663
        %v728 = vmul.f32 %v344, %v664
        %v729 = vmul.f32 %v345, %v665
        %v730 = vmul.f32 %v346, %v666
        %v731 = vmul.f32 %v347, %v667
        %v732 = vmul.f32 %v348, %v668
        %v733 = vmul.f32 %v349, %v669
        %v734 = vmul.f32 %v350, %v670
        %v735 = vmul.f32 %v351, %v671
        %v736 = vmul.f32 %v352, %v672
        %v737 = vmul.f32 %v353, %v673
        %v738 = vmul.f32 %v354, %v674
        %v739 = vmul.f32 %v355, %v675
        %v740 = vmul.f32 %v356, %v676
        %v741 = vmul.f32 %v357, %v677
        %742 = vst [vmem:[%s287] sm:$0xff] %v678
        %743 = vst [vmem:[%s287 + $0x8] sm:$0xff] %v679
        %744 = vst [vmem:[%s287 + $0x10] sm:$0xff] %v680
        %745 = vst [vmem:[%s287 + $0x18] sm:$0xff] %v681
        %746 = vst [vmem:[%s287 + $0x20] sm:$0xff] %v682
        %747 = vst [vmem:[%s287 + $0x28] sm:$0xff] %v683
        %748 = vst [vmem:[%s287 + $0x30] sm:$0xff] %v684
        %749 = vst [vmem:[%s287 + $0x38] sm:$0xff] %v685
        %750 = vst [vmem:[%s287 + $0x40] sm:$0xff] %v686
        %751 = vst [vmem:[%s287 + $0x48] sm:$0xff] %v687
        %752 = vst [vmem:[%s287 + $0x50] sm:$0xff] %v688
        %753 = vst [vmem:[%s287 + $0x58] sm:$0xff] %v689
        %754 = vst [vmem:[%s287 + $0x60] sm:$0xff] %v690
        %755 = vst [vmem:[%s287 + $0x68] sm:$0xff] %v691
        %756 = vst [vmem:[%s287 + $0x70] sm:$0xff] %v692
        %757 = vst [vmem:[%s287 + $0x78] sm:$0xff] %v693
        %758 = vst [vmem:[%s287 + $0x80] sm:$0xff] %v694
        %759 = vst [vmem:[%s287 + $0x88] sm:$0xff] %v695
        %760 = vst [vmem:[%s287 + $0x90] sm:$0xff] %v696
        %761 = vst [vmem:[%s287 + $0x98] sm:$0xff] %v697
        %762 = vst [vmem:[%s287 + $0xa0] sm:$0xff] %v698
        %763 = vst [vmem:[%s287 + $0xa8] sm:$0xff] %v699
        %764 = vst [vmem:[%s287 + $0xb0] sm:$0xff] %v700
        %765 = vst [vmem:[%s287 + $0xb8] sm:$0xff] %v701
        %766 = vst [vmem:[%s287 + $0xc0] sm:$0xff] %v702
        %767 = vst [vmem:[%s287 + $0xc8] sm:$0xff] %v703
        %768 = vst [vmem:[%s287 + $0xd0] sm:$0xff] %v704
        %769 = vst [vmem:[%s287 + $0xd8] sm:$0xff] %v705
        %770 = vst [vmem:[%s287 + $0xe0] sm:$0xff] %v706
        %771 = vst [vmem:[%s287 + $0xe8] sm:$0xff] %v707
        %772 = vst [vmem:[%s287 + $0xf0] sm:$0xff] %v708
        %773 = vst [vmem:[%s287 + $0xf8] sm:$0xff] %v709
        %774 = vst [vmem:[%s287 + $0x100] sm:$0xff] %v710
        %775 = vst [vmem:[%s287 + $0x108] sm:$0xff] %v711
        %776 = vst [vmem:[%s287 + $0x110] sm:$0xff] %v712
        %777 = vst [vmem:[%s287 + $0x118] sm:$0xff] %v713
        %778 = vst [vmem:[%s287 + $0x120] sm:$0xff] %v714
        %779 = vst [vmem:[%s287 + $0x128] sm:$0xff] %v715
        %780 = vst [vmem:[%s287 + $0x130] sm:$0xff] %v716
        %781 = vst [vmem:[%s287 + $0x138] sm:$0xff] %v717
        %782 = vst [vmem:[%s287 + $0x140] sm:$0xff] %v718
        %783 = vst [vmem:[%s287 + $0x148] sm:$0xff] %v719
        %784 = vst [vmem:[%s287 + $0x150] sm:$0xff] %v720
        %785 = vst [vmem:[%s287 + $0x158] sm:$0xff] %v721
        %786 = vst [vmem:[%s287 + $0x160] sm:$0xff] %v722
        %787 = vst [vmem:[%s287 + $0x168] sm:$0xff] %v723
        %788 = vst [vmem:[%s287 + $0x170] sm:$0xff] %v724
        %789 = vst [vmem:[%s287 + $0x178] sm:$0xff] %v725
        %790 = vst [vmem:[%s287 + $0x180] sm:$0xff] %v726
        %791 = vst [vmem:[%s287 + $0x188] sm:$0xff] %v727
        %792 = vst [vmem:[%s287 + $0x190] sm:$0xff] %v728
        %793 = vst [vmem:[%s287 + $0x198] sm:$0xff] %v729
        %794 = vst [vmem:[%s287 + $0x1a0] sm:$0xff] %v730
        %795 = vst [vmem:[%s287 + $0x1a8] sm:$0xff] %v731
        %796 = vst [vmem:[%s287 + $0x1b0] sm:$0xff] %v732
        %797 = vst [vmem:[%s287 + $0x1b8] sm:$0xff] %v733
        %798 = vst [vmem:[%s287 + $0x1c0] sm:$0xff] %v734
        %799 = vst [vmem:[%s287 + $0x1c8] sm:$0xff] %v735
        %800 = vst [vmem:[%s287 + $0x1d0] sm:$0xff] %v736
        %801 = vst [vmem:[%s287 + $0x1d8] sm:$0xff] %v737
        %802 = vst [vmem:[%s287 + $0x1e0] sm:$0xff] %v738
        %803 = vst [vmem:[%s287 + $0x1e8] sm:$0xff] %v739
        %804 = vst [vmem:[%s287 + $0x1f0] sm:$0xff] %v740
        %805 = vst [vmem:[%s287 + $0x1f8] sm:$0xff] %v741
        %s806 = sand.u32 %s125, 1
        %s807 = scalar_lea.sflag [#allocation4], %s806
        %s808 = sand.u32 %s125, 1
        %s809 = smul.addr %s808, 512
        %s810 = scalar_lea.vmem [#allocation8], %s809
        // Predicated region
        $region45: #{tpu_custom_call.1} parent=31 // pred_check
          %p811 = pneg %p135
        $region46: #{tpu_custom_call.1} parent=31 // pred_check_branch
          %813 = sbr.rel (%p811) target = $region48
        $region47: #{tpu_custom_call.1} parent=31 // pred_region
          %s814 = smul.u32 2, %s27
          %s815 = smul.u32 2, %s28
          %s817 = ssub.s32 8192, 8192
          %818 = vsyncadd %s807, %s817
          %s819 = smul.addr %s815, 16
          %s820 = smul.addr %s814, 32
          %s821 = sadd.s32 %s819, %s820
          %s822 = smul.addr %s821, 128
          %s823 = scalar_lea.hbm %s3, %s822
          %s824 = sshll.u32 %s810, 4
          %s825 = int_to_ptr.vmem [resolvable:$true] %s824
          %830 = dma.vmem_to_hbm [thread:$0]  %s825, 8192, %s823, %s807, 128, 128, 8
        $region48: #{tpu_custom_call.1} parent=31 // pred_fallthru
          _
      $region32: #{tpu_custom_call.1} parent=5 // pred_fallthru
        _
      %p831 = scmp.le.s32.totalorder 2, %s18
      // Predicated region
      $region49: #{tpu_custom_call.1} parent=5 // pred_check
        %p832 = pneg %p831
      $region50: #{tpu_custom_call.1} parent=5 // pred_check_branch
        %834 = sbr.rel (%p832) target = $region52
      $region51: #{tpu_custom_call.1} parent=5 // pred_region
        %s835 = ssub.s32 %s18, 2
        // Predicated region
        $region53: #{tpu_custom_call.1} parent=51 // pred_check
          %p836 = pneg %p141
        $region54: #{tpu_custom_call.1} parent=51 // pred_check_branch
          %838 = sbr.rel (%p836) target = $region56
        $region55: #{tpu_custom_call.1} parent=51 // pred_region
          %s839 = sand.u32 %s126, 1
          %s840 = scalar_lea.sflag [#allocation4], %s839
          %s841 = sand.u32 %s126, 1
          %s842 = smul.addr %s841, 512
          %s843 = scalar_lea.vmem [#allocation8], %s842
          %844 = dma.done %s840, 8192
        $region56: #{tpu_custom_call.1} parent=51 // pred_fallthru
          _
      $region52: #{tpu_custom_call.1} parent=5 // pred_fallthru
        _
    $region6: #{tpu_custom_call.1} parent=1 // loop_footer
      %s22 = sadd.s32 1, %s18
    $region7: #{tpu_custom_call.1} parent=1 // loop_footer_branch
      %17 = sbr.rel target = $region3
    $region8: #{tpu_custom_call.1} parent=1 // loop_exit
      _
    %845 = vsyncpa [#allocation3], 1
    %s846 = scalar_lea.sflag [#allocation3], 1
    %847 = vsyncpa %s846, 1
    %848 = vsyncpa [#allocation6], 1
    %s849 = scalar_lea.sflag [#allocation6], 1
    %850 = vsyncpa %s849, 1
    %851 = vsyncpa [#allocation4], 1
    %s852 = scalar_lea.sflag [#allocation4], 1
    %853 = vsyncpa %s852, 1

</llo_original>
